<compile_context>
chip_gen: v7x
topology: tpu7x:2x2x1
jax: 0.10.0
libtpu: 0.0.40
codegen_flags: <defaults>
</compile_context>

<pallas_src>
import functools
import math

import numpy as np
import jax
import jax.numpy as jnp
from jax.experimental import pallas as pl
from jax.experimental.pallas import tpu as pltpu

# Matmul operand dtype for the MXU path.  Keep f32 for bit-faithful validation;
# switch to jnp.bfloat16 on v6e/v7x for higher MXU throughput (elementwise math,
# softmax and LayerNorm always stay in f32) and re-validate against the
# reference.
MXU_DTYPE = jnp.float32


# ----------------------------------------------------------------------------
# Config helpers (mirror FEARecLayer.__init__ band selection logic)
# ----------------------------------------------------------------------------
def band_indices(max_seq_length, n_layers, global_ratio, fea_layer):
    F_ = max_seq_length // 2 + 1
    slide_step = F_ * (1 - global_ratio) // (n_layers - 1)
    local_ratio = 1.0 / n_layers
    filter_size = local_ratio * F_
    if global_ratio > 1.0 / n_layers:
        w, s = global_ratio, slide_step
    else:
        w, s = local_ratio, filter_size
    i = fea_layer
    left = int(F_ * (1 - w) - i * s)
    right = int(F_ - i * s)
    return left, right


def make_band_dft(L, left, right):
    """Band-restricted real DFT matrices for torch-default ("backward") norm.

    Returns:
      fs  (2*Mp, L): stacked [Re; Im] forward rfft rows for frequencies in
                     [left, right), zero-padded to Mp (multiple of 8) rows each.
      irs (L, 2*Mp): stacked [Re | Im] inverse (irfft, 1/L scale, Hermitian
                     alpha weights) columns, matching fs's padding.
      bp  (L, L)   : fused band-pass matrix = irs @ fs  (irfft o band o rfft).
    """
    M = right - left
    Mp = ((M + 7) // 8) * 8
    freqs = np.arange(left, right, dtype=np.float64)
    t = np.arange(L, dtype=np.float64)
    ang = 2.0 * np.pi * np.outer(freqs, t) / L          # (M, L), built in f64
    cos, sin = np.cos(ang), np.sin(ang)

    fr = np.zeros((Mp, L), np.float64)
    fi = np.zeros((Mp, L), np.float64)
    fr[:M] = cos
    fi[:M] = -sin
    fs = np.concatenate([fr, fi], axis=0)               # (2Mp, L)

    alpha = np.full((M,), 2.0)
    if left == 0:
        alpha[0] = 1.0
    if (L % 2 == 0) and (right == L // 2 + 1):
        alpha[-1] = 1.0                                  # Nyquist counted once
    ir = np.zeros((L, Mp), np.float64)
    ii = np.zeros((L, Mp), np.float64)
    ir[:, :M] = (cos * alpha[:, None]).T / L
    ii[:, :M] = (-sin * alpha[:, None]).T / L
    irs = np.concatenate([ir, ii], axis=1)               # (L, 2Mp)

    bp = irs @ fs                                        # (L, L) band-pass
    return (jnp.asarray(fs, jnp.float32),
            jnp.asarray(irs, jnp.float32),
            jnp.asarray(bp, jnp.float32),
            Mp)


# ----------------------------------------------------------------------------
# Kernel 1: QKV projection + frequency-band work
# ----------------------------------------------------------------------------
def _proj_band_kernel(x_ref, wqkv_ref, bqkv_ref, fs_ref, irs_ref, bp_ref,
                      pack_ref, mv_ref, *, D, Mp):
    x = x_ref[0]                                                    # (L, D)

    # Fused Q|K|V projection: one lane-dense (L, D) x (D, 3D) matmul.
    qkv = jnp.dot(x.astype(MXU_DTYPE), wqkv_ref[...].astype(MXU_DTYPE),
                  preferred_element_type=jnp.float32) + bqkv_ref[...]
    v = qkv[:, 2 * D:3 * D]

    # Band-limited rfft of q AND k fused into ONE lane-dense matmul:
    # fs (2Mp, L) x [q|k] (L, 2D) -> (2Mp, 2D).
    qkf = jnp.dot(fs_ref[...].astype(MXU_DTYPE),
                  qkv[:, 0:2 * D].astype(MXU_DTYPE),
                  preferred_element_type=jnp.float32)
    qr, kr = qkf[:Mp, 0:D], qkf[:Mp, D:2 * D]
    qi, ki = qkf[Mp:, 0:D], qkf[Mp:, D:2 * D]

    # Cross-spectrum q * conj(k), channel-averaged immediately.  The full
    # per-channel autocorrelation is only ever consumed through its channel
    # mean and the band-limited irfft is linear, so the mean commutes with it:
    # this removes the (L, 2Mp) x (2Mp, D) matmul entirely.
    rr_mean = jnp.mean(qr * kr + qi * ki, axis=1, keepdims=True)    # (Mp, 1)
    ri_mean = jnp.mean(qi * kr - qr * ki, axis=1, keepdims=True)    # (Mp, 1)
    res_mean = jnp.concatenate([rr_mean, ri_mean], axis=0)          # (2Mp, 1)
    mv_ref[0] = jnp.dot(irs_ref[...].astype(MXU_DTYPE),
                        res_mean.astype(MXU_DTYPE),
                        preferred_element_type=jnp.float32)         # (L, 1)

    # Band-pass of q, k, v fused into ONE (L,L) x (L,3D) matmul.
    s_qkv = jnp.dot(bp_ref[...].astype(MXU_DTYPE), qkv.astype(MXU_DTYPE),
                    preferred_element_type=jnp.float32)             # (L, 3D)

    # Single unmasked lane-dense store: [ sq | sk | sv | v ]  -> (L, 4D).
    pack_ref[0] = jnp.concatenate([s_qkv, v], axis=1)


# ----------------------------------------------------------------------------
# Kernel 2: time-delay aggregation + dual-domain attention + dense + LayerNorm
# ----------------------------------------------------------------------------
def _attn_mix_kernel(pack_ref, agg_ref, mask_ref, x_ref, wd_ref, bd_ref,
                     gamma_ref, beta_ref, out_ref, *, D, H, E, spatial_ratio):
    pk = pack_ref[0]                                                # (L, 4D)
    sq = pk[:, 0:D]
    sk = pk[:, D:2 * D]
    sv = pk[:, 2 * D:3 * D]
    v = pk[:, 3 * D:4 * D]

    # Time-domain autocorrelation aggregation (per-batch circulant mix matrix).
    ctx_time = jnp.dot(agg_ref[0].astype(MXU_DTYPE), v.astype(MXU_DTYPE),
                       preferred_element_type=jnp.float32)          # (L, D)

    mask = mask_ref[0]                                              # (L, L)
    wd = wd_ref[...]                                                # (D, D)
    r = spatial_ratio
    inv_sqrt_e = 1.0 / math.sqrt(E)

    # Fold the (1-r)/r mix directly into the dense projection: the per-head
    # spatial contexts are consumed through column blocks of Wd, so no in-kernel
    # concatenation is needed.
    hidden = jnp.dot(((1.0 - r) * ctx_time).astype(MXU_DTYPE),
                     wd.astype(MXU_DTYPE),
                     preferred_element_type=jnp.float32) + bd_ref[...]

    for h in range(H):
        qh = sq[:, h * E:(h + 1) * E]
        kh = sk[:, h * E:(h + 1) * E]
        vh = sv[:, h * E:(h + 1) * E]
        # Contract on the head dim of both operands (no explicit kh.T).
        scores = jax.lax.dot_general(
            qh.astype(MXU_DTYPE), kh.astype(MXU_DTYPE),
            (((1,), (1,)), ((), ())),
            preferred_element_type=jnp.float32) * inv_sqrt_e + mask
        # softmax over keys (f32, exact)
        m = jnp.max(scores, axis=-1, keepdims=True)
        p = jnp.exp(scores - m)
        probs = p / jnp.sum(p, axis=-1, keepdims=True)
        ctx_h = jnp.dot(probs.astype(MXU_DTYPE), vh.astype(MXU_DTYPE),
                        preferred_element_type=jnp.float32)         # (L, E)
        hidden = hidden + r * jnp.dot(ctx_h.astype(MXU_DTYPE),
                                      wd[h * E:(h + 1) * E, :].astype(MXU_DTYPE),
                                      preferred_element_type=jnp.float32)

    # out_dropout: identity at inference.  Residual + TF-style LayerNorm (f32).
    hres = hidden + x_ref[0]
    u = jnp.mean(hres, axis=-1, keepdims=True)
    d = hres - u
    s = jnp.mean(d * d, axis=-1, keepdims=True)
    normed = d * jax.lax.rsqrt(s + 1e-12)
    out_ref[0] = gamma_ref[...] * normed + beta_ref[...]


# ----------------------------------------------------------------------------
# Wrapper
# ----------------------------------------------------------------------------
def fearec_layer(x, attention_mask, params, cfg):
    """x: (B, L, D) f32; attention_mask: (B, 1, L, L) additive mask."""
    B, L, D = x.shape
    H = cfg["num_heads"]
    E = D // H
    left, right = cfg["left"], cfg["right"]
    fs, irs, bp, Mp = make_band_dft(L, left, right)

    wqkv = jnp.concatenate([params["wq"], params["wk"], params["wv"]], axis=1)
    bqkv = jnp.concatenate([params["bq"], params["bk"], params["bv"]],
                           axis=0).reshape(1, 3 * D)

    cparams = pltpu.CompilerParams(
        dimension_semantics=("parallel",))           # B grid steps -> both TCs on v7x

    pack, mv = pl.pallas_call(
        functools.partial(_proj_band_kernel, D=D, Mp=Mp),
        out_shape=(jax.ShapeDtypeStruct((B, L, 4 * D), jnp.float32),
                   jax.ShapeDtypeStruct((B, L, 1), jnp.float32)),
        grid_spec=pltpu.PrefetchScalarGridSpec(
            num_scalar_prefetch=0,
            grid=(B,),
            in_specs=[
                pl.BlockSpec((1, L, D), lambda b: (b, 0, 0)),       # x
                pl.BlockSpec((D, 3 * D), lambda b: (0, 0)),         # Wqkv
                pl.BlockSpec((1, 3 * D), lambda b: (0, 0)),         # bqkv
                pl.BlockSpec((2 * Mp, L), lambda b: (0, 0)),        # fwd DFT (stacked)
                pl.BlockSpec((L, 2 * Mp), lambda b: (0, 0)),        # inv DFT (stacked)
                pl.BlockSpec((L, L), lambda b: (0, 0)),             # band-pass matrix
            ],
            out_specs=[
                pl.BlockSpec((1, L, 4 * D), lambda b: (b, 0, 0)),   # packed slab
                pl.BlockSpec((1, L, 1), lambda b: (b, 0, 0)),       # mean autocorr
            ],
        ),
        compiler_params=cparams,
    )(x, wqkv, bqkv, fs, irs, bp)

    # ------------------------------------------------------------------
    # TODO(synk): data-dependent top-k delay selection (torch.topk + gather in
    # time_delay_agg_inference) has no clean Pallas equivalent; it runs in plain
    # JAX here and is folded into a per-batch circulant (L, L) delay-mix matrix
    # consumed by the second kernel.
    # ------------------------------------------------------------------
    mean_value = mv[..., 0]                                         # (B, L)
    top_k = int(cfg["factor"] * math.log(L))
    weights, delay = jax.lax.top_k(mean_value, top_k)               # (B, K)
    tmp_corr = jax.nn.softmax(weights, axis=-1)                     # (B, K)
    delay_w = jnp.zeros((B, L), jnp.float32).at[
        jnp.arange(B)[:, None], delay].add(tmp_corr)                # (B, L)
    shift = (jnp.arange(L)[None, :] - jnp.arange(L)[:, None]) % L   # (L, L)
    agg = delay_w[:, shift]                                         # (B, L, L)

    mask2 = attention_mask.reshape(B, L, L)                         # drop head-bcast dim

    out = pl.pallas_call(
        functools.partial(_attn_mix_kernel, D=D, H=H, E=E,
                          spatial_ratio=cfg["spatial_ratio"]),
        out_shape=jax.ShapeDtypeStruct((B, L, D), jnp.float32),
        grid_spec=pltpu.PrefetchScalarGridSpec(
            num_scalar_prefetch=0,
            grid=(B,),
            in_specs=[
                pl.BlockSpec((1, L, 4 * D), lambda b: (b, 0, 0)),   # packed slab
                pl.BlockSpec((1, L, L), lambda b: (b, 0, 0)),       # delay-mix matrix
                pl.BlockSpec((1, L, L), lambda b: (b, 0, 0)),       # attention mask
                pl.BlockSpec((1, L, D), lambda b: (b, 0, 0)),       # residual input
                pl.BlockSpec((D, D), lambda b: (0, 0)),             # Wd
                pl.BlockSpec((1, D), lambda b: (0, 0)),             # bd
                pl.BlockSpec((1, D), lambda b: (0, 0)),             # LN gamma
                pl.BlockSpec((1, D), lambda b: (0, 0)),             # LN beta
            ],
            out_specs=pl.BlockSpec((1, L, D), lambda b: (b, 0, 0)),
        ),
        compiler_params=cparams,
    )(pack, agg, mask2, x, params["wd"], params["bd"].reshape(1, D),
      params["ln_w"].reshape(1, D), params["ln_b"].reshape(1, D))
    return out


# ----------------------------------------------------------------------------
# Pure-JAX reference mirroring the PyTorch forward (eval-mode dropout)
# ----------------------------------------------------------------------------
def reference_fearec(x, attention_mask, params, cfg):
    B, L, D = x.shape
    H = cfg["num_heads"]
    E = D // H
    left, right = cfg["left"], cfg["right"]
    r = cfg["spatial_ratio"]
    hp = "highest"

    q = jnp.dot(x, params["wq"], precision=hp) + params["bq"]
    k = jnp.dot(x, params["wk"], precision=hp) + params["bk"]
    v = jnp.dot(x, params["wv"], precision=hp) + params["bv"]
    queries = q.reshape(B, L, H, E)
    keys = k.reshape(B, L, H, E)
    values = v.reshape(B, L, H, E)
    q_p = jnp.transpose(queries, (0, 2, 3, 1))                      # (B,H,E,L)
    k_p = jnp.transpose(keys, (0, 2, 3, 1))
    v_p = jnp.transpose(values, (0, 2, 3, 1))
    q_fft = jnp.fft.rfft(q_p, axis=-1)
    k_fft = jnp.fft.rfft(k_p, axis=-1)
    v_fft = jnp.fft.rfft(v_p, axis=-1)

    # band-restricted autocorrelation
    res = q_fft[..., left:right] * jnp.conj(k_fft[..., left:right])
    box = jnp.zeros_like(q_fft).at[..., left:right].set(res)
    corr = jnp.fft.irfft(box, n=L, axis=-1)                         # (B,H,E,L)

    # time_delay_agg_inference
    top_k = int(cfg["factor"] * math.log(L))
    mean_value = jnp.mean(jnp.mean(corr, axis=1), axis=1)           # (B,L)
    weights, delay = jax.lax.top_k(mean_value, top_k)
    tmp_corr = jax.nn.softmax(weights, axis=-1)
    init_index = jnp.arange(L)
    tmp_values = jnp.concatenate([v_p, v_p], axis=-1)
    delays_agg = jnp.zeros_like(v_p)
    for i in range(top_k):
        tmp_delay = init_index[None, None, None, :] + delay[:, i][:, None, None, None]
        tmp_delay = jnp.broadcast_to(tmp_delay, v_p.shape)
        pattern = jnp.take_along_axis(tmp_values, tmp_delay, axis=-1)
        delays_agg = delays_agg + pattern * tmp_corr[:, i][:, None, None, None]
    context_layer = jnp.transpose(delays_agg, (0, 3, 1, 2)).reshape(B, L, D)

    # dual-domain branch
    def bandpass(fft_arr):
        b = jnp.zeros_like(fft_arr).at[..., left:right].set(fft_arr[..., left:right])
        return jnp.fft.irfft(b, n=L, axis=-1)

    qt = jnp.transpose(bandpass(q_fft), (0, 1, 3, 2))               # (B,H,L,E)
    kt = jnp.transpose(bandpass(k_fft), (0, 1, 3, 2))
    vt = jnp.transpose(bandpass(v_fft), (0, 1, 3, 2))
    scores = jnp.einsum('bhle,bhme->bhlm', qt, kt, precision=hp) / math.sqrt(E)
    scores = scores + attention_mask
    probs = jax.nn.softmax(scores, axis=-1)
    ctx_sp = jnp.einsum('bhlm,bhme->bhle', probs, vt, precision=hp)
    ctx_sp = jnp.transpose(ctx_sp, (0, 2, 1, 3)).reshape(B, L, D)
    context_layer = (1 - r) * context_layer + r * ctx_sp

    hidden = jnp.dot(context_layer, params["wd"], precision=hp) + params["bd"]
    h = hidden + x
    u = jnp.mean(h, axis=-1, keepdims=True)
    s = jnp.mean((h - u) ** 2, axis=-1, keepdims=True)
    h = (h - u) / jnp.sqrt(s + 1e-12)
    return params["ln_w"] * h + params["ln_b"]


# ----------------------------------------------------------------------------
if __name__ == "__main__":
    B, L, D, H = 2, 64, 64, 2          # seq must satisfy int(10*ln(L)) <= L
    n_layers, global_ratio, spatial_ratio, factor = 2, 0.6, 0.5, 10
    fea_layer = 0
    left, right = band_indices(L, n_layers, global_ratio, fea_layer)
    cfg = dict(num_heads=H, left=left, right=right,
               spatial_ratio=spatial_ratio, factor=factor)

    key = jax.random.PRNGKey(0)
    ks = jax.random.split(key, 9)
    scale = 1.0 / math.sqrt(D)
    params = dict(
        wq=scale * jax.random.normal(ks[0], (D, D), jnp.float32),
        wk=scale * jax.random.normal(ks[1], (D, D), jnp.float32),
        wv=scale * jax.random.normal(ks[2], (D, D), jnp.float32),
        bq=0.02 * jax.random.normal(ks[3], (D,), jnp.float32),
        bk=0.02 * jax.random.normal(ks[4], (D,), jnp.float32),
        bv=0.02 * jax.random.normal(ks[5], (D,), jnp.float32),
        wd=scale * jax.random.normal(ks[6], (D, D), jnp.float32),
        bd=0.02 * jax.random.normal(ks[7], (D,), jnp.float32),
        ln_w=jnp.ones((D,), jnp.float32),
        ln_b=jnp.zeros((D,), jnp.float32),
    )
    x = jax.random.normal(ks[8], (B, L, D), jnp.float32)

    # Extended additive attention mask (B, 1, L, L): causal, 0 / -10000.
    causal = jnp.tril(jnp.ones((L, L), jnp.float32))
    attention_mask = jnp.broadcast_to(
        ((1.0 - causal) * -10000.0)[None, None, :, :], (B, 1, L, L))

    out = fearec_layer(x, attention_mask, params, cfg)
    out = jax.block_until_ready(out)

    ref = reference_fearec(x, attention_mask, params, cfg)
    assert out.shape == (B, L, D)
    err = float(jnp.max(jnp.abs(out - ref)))
    assert jnp.allclose(out, ref, atol=2e-3, rtol=2e-3), \
        f"mismatch vs reference, max abs err {err}"

    print("KERNEL_OK")
</pallas_src>

<mosaic_0001>
module attributes {stable_mosaic.version = 11 : i64} {
  func.func @_proj_band_kernel(%arg0: i32, %arg1: memref<1x64x64xf32, #tpu.memory_space<vmem>>, %arg2: memref<64x192xf32, #tpu.memory_space<vmem>>, %arg3: memref<1x192xf32, #tpu.memory_space<vmem>>, %arg4: memref<48x64xf32, #tpu.memory_space<vmem>>, %arg5: memref<64x48xf32, #tpu.memory_space<vmem>>, %arg6: memref<64x64xf32, #tpu.memory_space<vmem>>, %arg7: memref<1x64x256xf32, #tpu.memory_space<vmem>>, %arg8: memref<1x64x1xf32, #tpu.memory_space<vmem>>) attributes {dimension_semantics = [#tpu.dimension_semantics<parallel>], iteration_bounds = array<i64: 2>, scalar_prefetch = 0 : i64, scratch_operands = 0 : i64, tpu.core_type = #tpu.core_type<tc>, window_params = [{transform_indices = @transform_0, window_bounds = array<i64: 1, 64, 64>}, {pipeline_mode = #tpu.pipeline_mode<synchronous>, transform_indices = @transform_1, window_bounds = array<i64: 64, 192>}, {pipeline_mode = #tpu.pipeline_mode<synchronous>, transform_indices = @transform_2, window_bounds = array<i64: 1, 192>}, {pipeline_mode = #tpu.pipeline_mode<synchronous>, transform_indices = @transform_3, window_bounds = array<i64: 48, 64>}, {pipeline_mode = #tpu.pipeline_mode<synchronous>, transform_indices = @transform_4, window_bounds = array<i64: 64, 48>}, {pipeline_mode = #tpu.pipeline_mode<synchronous>, transform_indices = @transform_5, window_bounds = array<i64: 64, 64>}, {transform_indices = @transform_6, window_bounds = array<i64: 1, 64, 256>}, {transform_indices = @transform_7, window_bounds = array<i64: 1, 64, 1>}]} {
    %c0 = arith.constant 0 : index
    %c0_0 = arith.constant 0 : index
    %c0_1 = arith.constant 0 : index
    %0 = vector.load %arg1[%c0, %c0_0, %c0_1] : memref<1x64x64xf32, #tpu.memory_space<vmem>>, vector<1x64x64xf32>
    %1 = vector.shape_cast %0 : vector<1x64x64xf32> to vector<64x64xf32>
    %c0_2 = arith.constant 0 : index
    %c0_3 = arith.constant 0 : index
    %2 = vector.load %arg2[%c0_2, %c0_3] : memref<64x192xf32, #tpu.memory_space<vmem>>, vector<64x192xf32>
    %cst = arith.constant dense<0.000000e+00> : vector<64x192xf32>
    %3 = tpu.matmul %1, %2, %cst {dimension_numbers = #tpu.dot_dimension_numbers<[1], [0], [0], [1], [0, 0, 1, 1], [], []>} : vector<64x64xf32>, vector<64x192xf32>, vector<64x192xf32> -> vector<64x192xf32>
    %c0_4 = arith.constant 0 : index
    %c0_5 = arith.constant 0 : index
    %4 = vector.load %arg3[%c0_4, %c0_5] : memref<1x192xf32, #tpu.memory_space<vmem>>, vector<1x192xf32>
    %5 = vector.broadcast %4 : vector<1x192xf32> to vector<64x192xf32>
    %6 = arith.addf %3, %5 : vector<64x192xf32>
    %7 = vector.extract_strided_slice %6 {offsets = [0, 128], sizes = [64, 64], strides = [1, 1]} : vector<64x192xf32> to vector<64x64xf32>
    %c0_6 = arith.constant 0 : index
    %c0_7 = arith.constant 0 : index
    %8 = vector.load %arg4[%c0_6, %c0_7] : memref<48x64xf32, #tpu.memory_space<vmem>>, vector<48x64xf32>
    %9 = vector.extract_strided_slice %6 {offsets = [0, 0], sizes = [64, 128], strides = [1, 1]} : vector<64x192xf32> to vector<64x128xf32>
    %cst_8 = arith.constant dense<0.000000e+00> : vector<48x128xf32>
    %10 = tpu.matmul %8, %9, %cst_8 {dimension_numbers = #tpu.dot_dimension_numbers<[1], [0], [0], [1], [0, 0, 1, 1], [], []>} : vector<48x64xf32>, vector<64x128xf32>, vector<48x128xf32> -> vector<48x128xf32>
    %11 = vector.extract_strided_slice %10 {offsets = [0, 0], sizes = [24, 64], strides = [1, 1]} : vector<48x128xf32> to vector<24x64xf32>
    %12 = vector.extract_strided_slice %10 {offsets = [0, 64], sizes = [24, 64], strides = [1, 1]} : vector<48x128xf32> to vector<24x64xf32>
    %13 = vector.extract_strided_slice %10 {offsets = [24, 0], sizes = [24, 64], strides = [1, 1]} : vector<48x128xf32> to vector<24x64xf32>
    %14 = vector.extract_strided_slice %10 {offsets = [24, 64], sizes = [24, 64], strides = [1, 1]} : vector<48x128xf32> to vector<24x64xf32>
    %15 = arith.mulf %11, %12 : vector<24x64xf32>
    %16 = arith.mulf %13, %14 : vector<24x64xf32>
    %17 = arith.addf %15, %16 : vector<24x64xf32>
    %cst_9 = arith.constant dense<0.000000e+00> : vector<24xf32>
    %18 = vector.multi_reduction <add>, %17, %cst_9 [1] : vector<24x64xf32> to vector<24xf32>
    %19 = vector.shape_cast %18 : vector<24xf32> to vector<24x1xf32>
    %cst_10 = arith.constant 6.400000e+01 : f32
    %20 = vector.broadcast %cst_10 : f32 to vector<24x1xf32>
    %21 = arith.divf %19, %20 : vector<24x1xf32>
    %22 = arith.mulf %13, %12 : vector<24x64xf32>
    %23 = arith.mulf %11, %14 : vector<24x64xf32>
    %24 = arith.subf %22, %23 : vector<24x64xf32>
    %cst_11 = arith.constant dense<0.000000e+00> : vector<24xf32>
    %25 = vector.multi_reduction <add>, %24, %cst_11 [1] : vector<24x64xf32> to vector<24xf32>
    %26 = vector.shape_cast %25 : vector<24xf32> to vector<24x1xf32>
    %cst_12 = arith.constant 6.400000e+01 : f32
    %27 = vector.broadcast %cst_12 : f32 to vector<24x1xf32>
    %28 = arith.divf %26, %27 : vector<24x1xf32>
    %29 = tpu.concatenate %21, %28 in 0 : vector<24x1xf32>, vector<24x1xf32> -> vector<48x1xf32>
    %c0_13 = arith.constant 0 : index
    %c0_14 = arith.constant 0 : index
    %30 = vector.load %arg5[%c0_13, %c0_14] : memref<64x48xf32, #tpu.memory_space<vmem>>, vector<64x48xf32>
    %cst_15 = arith.constant dense<0.000000e+00> : vector<64x1xf32>
    %31 = tpu.matmul %30, %29, %cst_15 {dimension_numbers = #tpu.dot_dimension_numbers<[1], [0], [0], [1], [0, 0, 1, 1], [], []>} : vector<64x48xf32>, vector<48x1xf32>, vector<64x1xf32> -> vector<64x1xf32>
    %c0_16 = arith.constant 0 : index
    %c0_17 = arith.constant 0 : index
    %c0_18 = arith.constant 0 : index
    %32 = vector.load %arg8[%c0_16, %c0_17, %c0_18] : memref<1x64x1xf32, #tpu.memory_space<vmem>>, vector<1x64x1xf32>
    %33 = vector.shape_cast %32 : vector<1x64x1xf32> to vector<64x1xf32>
    %34 = vector.shape_cast %31 : vector<64x1xf32> to vector<1x64x1xf32>
    tpu.vector_store %arg8[%c0_16, %c0_17, %c0_18], %34 {strides = array<i32>} : memref<1x64x1xf32, #tpu.memory_space<vmem>>, vector<1x64x1xf32>,
    %c0_19 = arith.constant 0 : index
    %c0_20 = arith.constant 0 : index
    %35 = vector.load %arg6[%c0_19, %c0_20] : memref<64x64xf32, #tpu.memory_space<vmem>>, vector<64x64xf32>
    %cst_21 = arith.constant dense<0.000000e+00> : vector<64x192xf32>
    %36 = tpu.matmul %35, %6, %cst_21 {dimension_numbers = #tpu.dot_dimension_numbers<[1], [0], [0], [1], [0, 0, 1, 1], [], []>} : vector<64x64xf32>, vector<64x192xf32>, vector<64x192xf32> -> vector<64x192xf32>
    %37 = tpu.concatenate %36, %7 in 1 : vector<64x192xf32>, vector<64x64xf32> -> vector<64x256xf32>
    %c0_22 = arith.constant 0 : index
    %c0_23 = arith.constant 0 : index
    %c0_24 = arith.constant 0 : index
    %38 = vector.load %arg7[%c0_22, %c0_23, %c0_24] : memref<1x64x256xf32, #tpu.memory_space<vmem>>, vector<1x64x256xf32>
    %39 = vector.shape_cast %38 : vector<1x64x256xf32> to vector<64x256xf32>
    %40 = vector.shape_cast %37 : vector<64x256xf32> to vector<1x64x256xf32>
    tpu.vector_store %arg7[%c0_22, %c0_23, %c0_24], %40 {strides = array<i32>} : memref<1x64x256xf32, #tpu.memory_space<vmem>>, vector<1x64x256xf32>,
    return
  }
  func.func @transform_0(%arg0: i32) -> (i32, i32, i32) {
    %c0_i32 = arith.constant 0 : i32
    %c0_i32_0 = arith.constant 0 : i32
    %c0_i32_1 = arith.constant 0 : i32
    return %arg0, %c0_i32, %c0_i32_0 : i32, i32, i32
  }
  func.func @transform_1(%arg0: i32) -> (i32, i32) {
    %c0_i32 = arith.constant 0 : i32
    %c0_i32_0 = arith.constant 0 : i32
    %c0_i32_1 = arith.constant 0 : i32
    return %c0_i32, %c0_i32_0 : i32, i32
  }
  func.func @transform_2(%arg0: i32) -> (i32, i32) {
    %c0_i32 = arith.constant 0 : i32
    %c0_i32_0 = arith.constant 0 : i32
    %c0_i32_1 = arith.constant 0 : i32
    return %c0_i32, %c0_i32_0 : i32, i32
  }
  func.func @transform_3(%arg0: i32) -> (i32, i32) {
    %c0_i32 = arith.constant 0 : i32
    %c0_i32_0 = arith.constant 0 : i32
    %c0_i32_1 = arith.constant 0 : i32
    return %c0_i32, %c0_i32_0 : i32, i32
  }
  func.func @transform_4(%arg0: i32) -> (i32, i32) {
    %c0_i32 = arith.constant 0 : i32
    %c0_i32_0 = arith.constant 0 : i32
    %c0_i32_1 = arith.constant 0 : i32
    return %c0_i32, %c0_i32_0 : i32, i32
  }
  func.func @transform_5(%arg0: i32) -> (i32, i32) {
    %c0_i32 = arith.constant 0 : i32
    %c0_i32_0 = arith.constant 0 : i32
    %c0_i32_1 = arith.constant 0 : i32
    return %c0_i32, %c0_i32_0 : i32, i32
  }
  func.func @transform_6(%arg0: i32) -> (i32, i32, i32) {
    %c0_i32 = arith.constant 0 : i32
    %c0_i32_0 = arith.constant 0 : i32
    %c0_i32_1 = arith.constant 0 : i32
    return %arg0, %c0_i32, %c0_i32_0 : i32, i32, i32
  }
  func.func @transform_7(%arg0: i32) -> (i32, i32, i32) {
    %c0_i32 = arith.constant 0 : i32
    %c0_i32_0 = arith.constant 0 : i32
    %c0_i32_1 = arith.constant 0 : i32
    return %arg0, %c0_i32, %c0_i32_0 : i32, i32, i32
  }
}

</mosaic_0001>

<llo_original>
// kernel: tpu_custom_call.1
$region0: #{tpu_custom_call.1}
  #allocation0 [shape = 'u32[]', space=smem, size = 0x4, offset = 0x4, fixed_abs, tag = 'smem constant byte address 0x4 - core index']
  #allocation1 [shape = 'u32[144,128]{1,0:T(1,128)}', space=vmem, size = 0x12000, scoped, tag = 'internal scratch']
  %s0 = inlined_call_operand.hbm [shape: f32[2,64,64], index: 0, kind: input, shape index: {}]
  %s1 = inlined_call_operand.hbm [shape: f32[64,192], index: 1, kind: input, shape index: {}]
  %s2 = inlined_call_operand.vmem [shape: f32[1,192], index: 2, kind: input, shape index: {}]
  %s3 = inlined_call_operand.vmem [shape: f32[48,64], index: 3, kind: input, shape index: {}]
  %s4 = inlined_call_operand.vmem [shape: f32[64,48], index: 4, kind: input, shape index: {}]
  %s5 = inlined_call_operand.vmem [shape: f32[64,64], index: 5, kind: input, shape index: {}]
  %s6 = inlined_call_operand.hbm [shape: f32[2,64,256], index: 6, kind: output, shape index: {0}]
  %s7 = inlined_call_operand.vmem [shape: f32[2,64,1], index: 7, kind: output, shape index: {1}]
  %8 = xla_tuple %s6, %s7
  %s9 = sld [smem:[#allocation0]]
  $region73: #{tpu_custom_call.1} parent=0
    _
  %s11 = ssub.s32 1, %s9
  %s12 = scalar_select 0, %s11, %s9
  $region1: #{tpu_custom_call.1} parent=0
    #allocation2 [shape = 'u8[65536]{0}', space=vmem, size = 0x10000, scoped, tag = 'input window, operand 0']
    #allocation3 [shape = 's32[2]{0}', space=sflag, size = 0x8, scoped, tag = 'scoped memory for tpu_custom_call.1']
    #allocation4 [shape = 's32[2]{0}', space=sflag, size = 0x8, scoped, tag = 'scoped memory for tpu_custom_call.1']
    #allocation5 [shape = 'u8[65536]{0}', space=vmem, size = 0x10000, scoped, tag = 'input window, operand 1, single buffered']
    #allocation6 [shape = 's32[1]{0}', space=sflag, size = 0x4, scoped, tag = 'scoped memory for tpu_custom_call.1']
    #allocation7 [shape = 'u8[131072]{0}', space=vmem, size = 0x20000, scoped, tag = 'output window, operand 0']
    %13 = vsyncpa [#allocation3], 0
    %s14 = scalar_lea.sflag [#allocation3], 1
    %15 = vsyncpa %s14, 0
    %16 = vsyncpa [#allocation6], 0
    %17 = vsyncpa [#allocation4], 0
    %s18 = scalar_lea.sflag [#allocation4], 1
    %19 = vsyncpa %s18, 0
    loop: start=0, step=1, limit=4
    $region2: #{tpu_custom_call.1} parent=1 // loop_pre_header
      _
    $region3: #{tpu_custom_call.1} parent=1 // loop_header
      %s21 = sphi 0, %s25
      %p22 = scmp.ge.s32.totalorder %s21, 4
      %s31 = sphi 0, %s33
      %s34 = sphi 0, %s31
      %s35 = sphi 0, %s34
      %s51 = sphi 0, %s35
      %s55 = sphi 0, %s55
      %s57 = sphi 0, %s55
      %s58 = sphi 0, %s57
      %s72 = sphi 0, %s58
      %s76 = sphi 0, %s76
      %s78 = sphi 0, %s76
      %s79 = sphi 0, %s78
      %s93 = sphi 0, %s79
      %s97 = sphi 0, %s97
      %s99 = sphi 0, %s97
      %s100 = sphi 0, %s99
      %s114 = sphi 0, %s100
      %s118 = sphi 0, %s118
      %s120 = sphi 0, %s118
      %s121 = sphi 0, %s120
      %s135 = sphi 0, %s121
      %s139 = sphi 0, %s139
      %s141 = sphi 0, %s139
      %s142 = sphi 0, %s141
      %s156 = sphi 0, %s142
      %s162 = sphi 0, %s164
      %s165 = sphi 0, %s162
      %s166 = sphi 0, %s165
      %s182 = sphi 0, %s166
      %s188 = sphi 0, %s190
      %s191 = sphi 0, %s188
      %s192 = sphi 0, %s191
      %s208 = sphi 0, %s192
    $region4: #{tpu_custom_call.1} parent=1 // loop_header_branch
      %24 = sbr.rel (%p22) target = $region8
    $region5: #{tpu_custom_call.1} parent=1 // loop_body
      %s26 = ssub.s32 %s21, 1
      %s27 = ssub.s32 %s21, 2
      %s28 = sadd.s32 %s21, 1
      %s29 = ssub.s32 %s21, %s28
      %p30 = scmp.eq.s32.totalorder %s29, 0
      %s32 = sadd.s32 %s31, 1
      %s33 = scalar_select %p30, %s31, %s32
      %p36 = pneg %p30
      %p37 = scmp.eq.s32.totalorder %s21, 1
      %p38 = por %p36, %p37
      %p39 = scmp.ne.s32.totalorder %s31, %s34
      %p40 = scmp.eq.s32.totalorder %s21, 0
      %p41 = por %p39, %p40
      %p42 = scmp.ne.s32.totalorder %s31, %s34
      %p43 = scmp.eq.s32.totalorder %s26, 1
      %p44 = por %p42, %p43
      %p45 = scmp.ne.s32.totalorder %s34, %s35
      %p46 = scmp.eq.s32.totalorder %s26, 0
      %p47 = por %p45, %p46
      %p48 = scmp.ne.s32.totalorder %s34, %s35
      %p49 = scmp.eq.s32.totalorder %s27, 1
      %p50 = por %p48, %p49
      %p52 = scmp.ne.s32.totalorder %s35, %s51
      %p53 = scmp.eq.s32.totalorder %s27, 0
      %p54 = por %p52, %p53
      %s56 = sadd.s32 %s55, 1
      %p59 = scmp.eq.s32.totalorder %s21, 1
      %p60 = scmp.ne.s32.totalorder %s55, %s57
      %p61 = scmp.eq.s32.totalorder %s21, 0
      %p62 = por %p60, %p61
      %p63 = scmp.ne.s32.totalorder %s55, %s57
      %p64 = scmp.eq.s32.totalorder %s26, 1
      %p65 = por %p63, %p64
      %p66 = scmp.ne.s32.totalorder %s57, %s58
      %p67 = scmp.eq.s32.totalorder %s26, 0
      %p68 = por %p66, %p67
      %p69 = scmp.ne.s32.totalorder %s57, %s58
      %p70 = scmp.eq.s32.totalorder %s27, 1
      %p71 = por %p69, %p70
      %p73 = scmp.ne.s32.totalorder %s58, %s72
      %p74 = scmp.eq.s32.totalorder %s27, 0
      %p75 = por %p73, %p74
      %s77 = sadd.s32 %s76, 1
      %p80 = scmp.eq.s32.totalorder %s21, 1
      %p81 = scmp.ne.s32.totalorder %s76, %s78
      %p82 = scmp.eq.s32.totalorder %s21, 0
      %p83 = por %p81, %p82
      %p84 = scmp.ne.s32.totalorder %s76, %s78
      %p85 = scmp.eq.s32.totalorder %s26, 1
      %p86 = por %p84, %p85
      %p87 = scmp.ne.s32.totalorder %s78, %s79
      %p88 = scmp.eq.s32.totalorder %s26, 0
      %p89 = por %p87, %p88
      %p90 = scmp.ne.s32.totalorder %s78, %s79
      %p91 = scmp.eq.s32.totalorder %s27, 1
      %p92 = por %p90, %p91
      %p94 = scmp.ne.s32.totalorder %s79, %s93
      %p95 = scmp.eq.s32.totalorder %s27, 0
      %p96 = por %p94, %p95
      %s98 = sadd.s32 %s97, 1
      %p101 = scmp.eq.s32.totalorder %s21, 1
      %p102 = scmp.ne.s32.totalorder %s97, %s99
      %p103 = scmp.eq.s32.totalorder %s21, 0
      %p104 = por %p102, %p103
      %p105 = scmp.ne.s32.totalorder %s97, %s99
      %p106 = scmp.eq.s32.totalorder %s26, 1
      %p107 = por %p105, %p106
      %p108 = scmp.ne.s32.totalorder %s99, %s100
      %p109 = scmp.eq.s32.totalorder %s26, 0
      %p110 = por %p108, %p109
      %p111 = scmp.ne.s32.totalorder %s99, %s100
      %p112 = scmp.eq.s32.totalorder %s27, 1
      %p113 = por %p111, %p112
      %p115 = scmp.ne.s32.totalorder %s100, %s114
      %p116 = scmp.eq.s32.totalorder %s27, 0
      %p117 = por %p115, %p116
      %s119 = sadd.s32 %s118, 1
      %p122 = scmp.eq.s32.totalorder %s21, 1
      %p123 = scmp.ne.s32.totalorder %s118, %s120
      %p124 = scmp.eq.s32.totalorder %s21, 0
      %p125 = por %p123, %p124
      %p126 = scmp.ne.s32.totalorder %s118, %s120
      %p127 = scmp.eq.s32.totalorder %s26, 1
      %p128 = por %p126, %p127
      %p129 = scmp.ne.s32.totalorder %s120, %s121
      %p130 = scmp.eq.s32.totalorder %s26, 0
      %p131 = por %p129, %p130
      %p132 = scmp.ne.s32.totalorder %s120, %s121
      %p133 = scmp.eq.s32.totalorder %s27, 1
      %p134 = por %p132, %p133
      %p136 = scmp.ne.s32.totalorder %s121, %s135
      %p137 = scmp.eq.s32.totalorder %s27, 0
      %p138 = por %p136, %p137
      %s140 = sadd.s32 %s139, 1
      %p143 = scmp.eq.s32.totalorder %s21, 1
      %p144 = scmp.ne.s32.totalorder %s139, %s141
      %p145 = scmp.eq.s32.totalorder %s21, 0
      %p146 = por %p144, %p145
      %p147 = scmp.ne.s32.totalorder %s139, %s141
      %p148 = scmp.eq.s32.totalorder %s26, 1
      %p149 = por %p147, %p148
      %p150 = scmp.ne.s32.totalorder %s141, %s142
      %p151 = scmp.eq.s32.totalorder %s26, 0
      %p152 = por %p150, %p151
      %p153 = scmp.ne.s32.totalorder %s141, %s142
      %p154 = scmp.eq.s32.totalorder %s27, 1
      %p155 = por %p153, %p154
      %p157 = scmp.ne.s32.totalorder %s142, %s156
      %p158 = scmp.eq.s32.totalorder %s27, 0
      %p159 = por %p157, %p158
      %s160 = ssub.s32 %s21, %s28
      %p161 = scmp.eq.s32.totalorder %s160, 0
      %s163 = sadd.s32 %s162, 1
      %s164 = scalar_select %p161, %s162, %s163
      %p167 = pneg %p161
      %p168 = scmp.eq.s32.totalorder %s21, 1
      %p169 = por %p167, %p168
      %p170 = scmp.ne.s32.totalorder %s162, %s165
      %p171 = scmp.eq.s32.totalorder %s21, 0
      %p172 = por %p170, %p171
      %p173 = scmp.ne.s32.totalorder %s162, %s165
      %p174 = scmp.eq.s32.totalorder %s26, 1
      %p175 = por %p173, %p174
      %p176 = scmp.ne.s32.totalorder %s165, %s166
      %p177 = scmp.eq.s32.totalorder %s26, 0
      %p178 = por %p176, %p177
      %p179 = scmp.ne.s32.totalorder %s165, %s166
      %p180 = scmp.eq.s32.totalorder %s27, 1
      %p181 = por %p179, %p180
      %p183 = scmp.ne.s32.totalorder %s166, %s182
      %p184 = scmp.eq.s32.totalorder %s27, 0
      %p185 = por %p183, %p184
      %s186 = ssub.s32 %s21, %s28
      %p187 = scmp.eq.s32.totalorder %s186, 0
      %s189 = sadd.s32 %s188, 1
      %s190 = scalar_select %p187, %s188, %s189
      %p193 = pneg %p187
      %p194 = scmp.eq.s32.totalorder %s21, 1
      %p195 = por %p193, %p194
      %p196 = scmp.ne.s32.totalorder %s188, %s191
      %p197 = scmp.eq.s32.totalorder %s21, 0
      %p198 = por %p196, %p197
      %p199 = scmp.ne.s32.totalorder %s188, %s191
      %p200 = scmp.eq.s32.totalorder %s26, 1
      %p201 = por %p199, %p200
      %p202 = scmp.ne.s32.totalorder %s191, %s192
      %p203 = scmp.eq.s32.totalorder %s26, 0
      %p204 = por %p202, %p203
      %p205 = scmp.ne.s32.totalorder %s191, %s192
      %p206 = scmp.eq.s32.totalorder %s27, 1
      %p207 = por %p205, %p206
      %p209 = scmp.ne.s32.totalorder %s192, %s208
      %p210 = scmp.eq.s32.totalorder %s27, 0
      %p211 = por %p209, %p210
      %p212 = scmp.le.s32.totalorder 1, %s21
      %p213 = scmp.lt.s32.totalorder %s21, 3
      %p214 = pnand %p212, %p213
      %p215 = pneg %p214
      // Predicated region
      $region9: #{tpu_custom_call.1} parent=5 // pred_check
        _
      $region10: #{tpu_custom_call.1} parent=5 // pred_check_branch
        %217 = sbr.rel (%p214) target = $region12
      $region11: #{tpu_custom_call.1} parent=5 // pred_region
        %s218 = ssub.s32 %s21, 1
        // Predicated region
        $region13: #{tpu_custom_call.1} parent=11 // pred_check
          %p219 = pneg %p68
        $region14: #{tpu_custom_call.1} parent=11 // pred_check_branch
          %221 = sbr.rel (%p219) target = $region16
        $region15: #{tpu_custom_call.1} parent=11 // pred_region
          %s223 = ssub.s32 2048, 2048
          %224 = vsyncadd [#allocation6], %s223
          %s225 = sshll.u32 [#allocation5], 4
          %s226 = int_to_ptr.vmem [resolvable:$true] %s225
          %231 = dma.hbm_to_vmem [thread:$0]  %s1, 2048, %s226, [#allocation6], 256, 256, 16
        $region16: #{tpu_custom_call.1} parent=11 // pred_fallthru
          _
        // Predicated region
        $region17: #{tpu_custom_call.1} parent=11 // pred_check
          %p232 = pneg %p89
        $region18: #{tpu_custom_call.1} parent=11 // pred_check_branch
          %234 = sbr.rel (%p232) target = $region20
        $region19: #{tpu_custom_call.1} parent=11 // pred_region
          _
        $region20: #{tpu_custom_call.1} parent=11 // pred_fallthru
          _
        // Predicated region
        $region21: #{tpu_custom_call.1} parent=11 // pred_check
          %p235 = pneg %p110
        $region22: #{tpu_custom_call.1} parent=11 // pred_check_branch
          %237 = sbr.rel (%p235) target = $region24
        $region23: #{tpu_custom_call.1} parent=11 // pred_region
          _
        $region24: #{tpu_custom_call.1} parent=11 // pred_fallthru
          _
        // Predicated region
        $region25: #{tpu_custom_call.1} parent=11 // pred_check
          %p238 = pneg %p131
        $region26: #{tpu_custom_call.1} parent=11 // pred_check_branch
          %240 = sbr.rel (%p238) target = $region28
        $region27: #{tpu_custom_call.1} parent=11 // pred_region
          _
        $region28: #{tpu_custom_call.1} parent=11 // pred_fallthru
          _
        // Predicated region
        $region29: #{tpu_custom_call.1} parent=11 // pred_check
          %p241 = pneg %p152
        $region30: #{tpu_custom_call.1} parent=11 // pred_check_branch
          %243 = sbr.rel (%p241) target = $region32
        $region31: #{tpu_custom_call.1} parent=11 // pred_region
          _
        $region32: #{tpu_custom_call.1} parent=11 // pred_fallthru
          _
      $region12: #{tpu_custom_call.1} parent=5 // pred_fallthru
        _
      %p244 = scmp.lt.s32.totalorder %s21, 2
      // Predicated region
      $region33: #{tpu_custom_call.1} parent=5 // pred_check
        %p245 = pneg %p244
      $region34: #{tpu_custom_call.1} parent=5 // pred_check_branch
        %247 = sbr.rel (%p245) target = $region36
      $region35: #{tpu_custom_call.1} parent=5 // pred_region
        // Predicated region
        $region37: #{tpu_custom_call.1} parent=35 // pred_check
          %p248 = pneg %p41
        $region38: #{tpu_custom_call.1} parent=35 // pred_check_branch
          %250 = sbr.rel (%p248) target = $region40
        $region39: #{tpu_custom_call.1} parent=35 // pred_region
          %s251 = sand.u32 %s31, 1
          %s252 = scalar_lea.sflag [#allocation3], %s251
          %s253 = sand.u32 %s31, 1
          %s254 = smul.addr %s253, 64
          %s255 = scalar_lea.vmem [#allocation2], %s254
          %s257 = ssub.s32 1024, 1024
          %258 = vsyncadd %s252, %s257
          %s259 = smul.addr %s21, 8
          %s260 = smul.addr %s259, 128
          %s261 = scalar_lea.hbm %s0, %s260
          %s262 = sshll.u32 %s255, 4
          %s263 = int_to_ptr.vmem [resolvable:$true] %s262
          %268 = dma.hbm_to_vmem [thread:$0]  %s261, 1024, %s263, %s252, 128, 128, 8
        $region40: #{tpu_custom_call.1} parent=35 // pred_fallthru
          _
      $region36: #{tpu_custom_call.1} parent=5 // pred_fallthru
        _
      %p269 = scmp.le.s32.totalorder 1, %s21
      %p270 = scmp.lt.s32.totalorder %s21, 3
      %p271 = pnand %p269, %p270
      %p272 = pneg %p271
      // Predicated region
      $region41: #{tpu_custom_call.1} parent=5 // pred_check
        _
      $region42: #{tpu_custom_call.1} parent=5 // pred_check_branch
        %274 = sbr.rel (%p271) target = $region44
      $region43: #{tpu_custom_call.1} parent=5 // pred_region
        %s275 = ssub.s32 %s21, 1
        %s276 = sand.u32 %s34, 1
        %s277 = scalar_lea.sflag [#allocation3], %s276
        %s278 = sand.u32 %s34, 1
        %s279 = smul.addr %s278, 64
        %s280 = scalar_lea.vmem [#allocation2], %s279
        // Predicated region
        $region45: #{tpu_custom_call.1} parent=43 // pred_check
          %p281 = pneg %p47
        $region46: #{tpu_custom_call.1} parent=43 // pred_check_branch
          %283 = sbr.rel (%p281) target = $region48
        $region47: #{tpu_custom_call.1} parent=43 // pred_region
          %284 = dma.done %s277, 1024
        $region48: #{tpu_custom_call.1} parent=43 // pred_fallthru
          _
        // Predicated region
        $region49: #{tpu_custom_call.1} parent=43 // pred_check
          %p285 = pneg %p68
        $region50: #{tpu_custom_call.1} parent=43 // pred_check_branch
          %287 = sbr.rel (%p285) target = $region52
        $region51: #{tpu_custom_call.1} parent=43 // pred_region
          %288 = dma.done [#allocation6], 2048
        $region52: #{tpu_custom_call.1} parent=43 // pred_fallthru
          _
        %s289 = sand.u32 %s34, 1
        %s290 = scalar_lea.sflag [#allocation3], %s289
        %s291 = sand.u32 %s34, 1
        %s292 = smul.addr %s291, 64
        %s293 = scalar_lea.vmem [#allocation2], %s292
        %p294 = pneg %p47
        %p295 = pneg %p44
        %p296 = pneg %p68
        %p297 = pneg %p65
        %p298 = pneg %p89
        %p299 = pneg %p86
        %p300 = pneg %p110
        %p301 = pneg %p107
        %p302 = pneg %p131
        %p303 = pneg %p128
        %p304 = pneg %p152
        %p305 = pneg %p149
        %p306 = pneg %p178
        %p307 = pneg %p175
        %s308 = sand.u32 %s165, 1
        %s309 = scalar_lea.sflag [#allocation4], %s308
        %s310 = sand.u32 %s165, 1
        %s311 = smul.addr %s310, 128
        %s312 = scalar_lea.vmem [#allocation7], %s311
        %p313 = pneg %p204
        %p314 = pneg %p201
        %p315 = scmp.lt.s32.totalorder %s26, 1
        %s316 = scalar_select %p315, %s26, 1
        %s317 = smul.addr %s316, 8
        %s318 = smul.addr %s317, 8
        %s319 = scalar_lea.vmem %s7, %s318
        %p320 = scmp.lt.s32.totalorder %s26, 1
        %s321 = scalar_select %p320, %s26, 1
        %s322 = smul.addr %s321, 8
        %s323 = smul.addr %s322, 8
        %s324 = scalar_lea.vmem %s7, %s323
        %v325 = vld [vmem:[%s280] sm:$0xff]
        %v326 = vld [vmem:[%s280 + $0x8] sm:$0xff]
        %v327 = vld [vmem:[%s280 + $0x10] sm:$0xff]
        %v328 = vld [vmem:[%s280 + $0x18] sm:$0xff]
        %v329 = vld [vmem:[%s280 + $0x20] sm:$0xff]
        %v330 = vld [vmem:[%s280 + $0x28] sm:$0xff]
        %v331 = vld [vmem:[%s280 + $0x30] sm:$0xff]
        %v332 = vld [vmem:[%s280 + $0x38] sm:$0xff]
        %v333 = vld [vmem:[#allocation5] sm:$0xff]
        %v334 = vld [vmem:[#allocation5 + $0x8] sm:$0xff]
        %v335 = vld [vmem:[#allocation5 + $0x10] sm:$0xff]
        %v336 = vld [vmem:[#allocation5 + $0x18] sm:$0xff]
        %v337 = vld [vmem:[#allocation5 + $0x20] sm:$0xff]
        %v338 = vld [vmem:[#allocation5 + $0x28] sm:$0xff]
        %v339 = vld [vmem:[#allocation5 + $0x30] sm:$0xff]
        %v340 = vld [vmem:[#allocation5 + $0x38] sm:$0xff]
        %v341 = vld [vmem:[#allocation5 + $0x40] sm:$0xff]
        %v342 = vld [vmem:[#allocation5 + $0x48] sm:$0xff]
        %v343 = vld [vmem:[#allocation5 + $0x50] sm:$0xff]
        %v344 = vld [vmem:[#allocation5 + $0x58] sm:$0xff]
        %v345 = vld [vmem:[#allocation5 + $0x60] sm:$0xff]
        %v346 = vld [vmem:[#allocation5 + $0x68] sm:$0xff]
        %v347 = vld [vmem:[#allocation5 + $0x70] sm:$0xff]
        %v348 = vld [vmem:[#allocation5 + $0x78] sm:$0xff]
        %v349 = vld [vmem:[%s2] sm:$0x3]
        %v351 = vlaneseq
        %v352 = vshrl.u32 %v351, 7
        %v353 = vsub.s32 0, %v352
        %v354 = vrot.slane %v349, %v353
        %v355 = vlaneseq
        %v356 = vshrl.u32 %v355, 7
        %v357 = vsub.s32 1, %v356
        %v358 = vrot.slane %v349, %v357
        %vm361 = vcmask 523264
        %v363 = vsel %vm361, %v325, 0
        %v366 = vsel %vm361, %v326, 0
        %v369 = vsel %vm361, %v327, 0
        %v372 = vsel %vm361, %v328, 0
        %v375 = vsel %vm361, %v329, 0
        %v378 = vsel %vm361, %v330, 0
        %v381 = vsel %vm361, %v331, 0
        %v384 = vsel %vm361, %v332, 0
        %386 = vmatprep.subr.mxu0 %v334
        %387 = vmatpush1.msra.mxu0 %v333
        %388 = vmatprep.subr.mxu0 %v336
        %389 = vmatpush1.msra.mxu0 %v335
        %390 = vmatprep.subr.mxu0 %v338
        %391 = vmatpush1.msra.mxu0 %v337
        %392 = vmatprep.subr.mxu0 %v340
        %393 = vmatpush1.msra.mxu0 %v339
        %394 = vmatprep.subr.mxu0 %v342
        %395 = vmatpush1.msra.mxu0 %v341
        %396 = vmatprep.subr.mxu0 %v344
        %397 = vmatpush1.msra.mxu0 %v343
        %398 = vmatprep.subr.mxu0 %v346
        %399 = vmatpush1.msra.mxu0 %v345
        %400 = vmatprep.subr.mxu0 %v348
        %401 = vmatpush1.msra.mxu0 %v347
        %402 = vmatprep.subr.mxu0 0.0
        %403 = vmatpush1.msra.mxu0 0.0
        %404 = vmatprep.subr.mxu0 0.0
        %405 = vmatpush1.msra.mxu0 0.0
        %406 = vmatprep.subr.mxu0 0.0
        %407 = vmatpush1.msra.mxu0 0.0
        %408 = vmatprep.subr.mxu0 0.0
        %409 = vmatpush1.msra.mxu0 0.0
        %410 = vmatprep.subr.mxu0 0.0
        %411 = vmatpush1.msra.mxu0 0.0
        %412 = vmatprep.subr.mxu0 0.0
        %413 = vmatpush1.msra.mxu0 0.0
        %414 = vmatprep.subr.mxu0 0.0
        %415 = vmatpush1.msra.mxu0 0.0
        %416 = vmatprep.subr.mxu0 0.0
        %417 = vmatpush1.msra.mxu0 0.0
        %418 = vmatprep.subr.mxu0 0.0
        %419 = vmatpush1.msra.mxu0 0.0
        %420 = vmatprep.subr.mxu0 0.0
        %421 = vmatpush1.msra.mxu0 0.0
        %422 = vmatprep.subr.mxu0 0.0
        %423 = vmatpush1.msra.mxu0 0.0
        %424 = vmatprep.subr.mxu0 0.0
        %425 = vmatpush1.msra.mxu0 0.0
        %426 = vmatprep.subr.mxu0 0.0
        %427 = vmatpush1.msra.mxu0 0.0
        %428 = vmatprep.subr.mxu0 0.0
        %429 = vmatpush1.msra.mxu0 0.0
        %430 = vmatprep.subr.mxu0 0.0
        %431 = vmatpush1.msra.mxu0 0.0
        %432 = vmatprep.subr.mxu0 0.0
        %433 = vmatpush1.msra.mxu0 0.0
        %434 = vmatprep.subr.mxu0 0.0
        %435 = vmatpush1.msra.mxu0 0.0
        %436 = vmatprep.subr.mxu0 0.0
        %437 = vmatpush1.msra.mxu0 0.0
        %438 = vmatprep.subr.mxu0 0.0
        %439 = vmatpush1.msra.mxu0 0.0
        %440 = vmatprep.subr.mxu0 0.0
        %441 = vmatpush1.msra.mxu0 0.0
        %442 = vmatprep.subr.mxu0 0.0
        %443 = vmatpush1.msra.mxu0 0.0
        %444 = vmatprep.subr.mxu0 0.0
        %445 = vmatpush1.msra.mxu0 0.0
        %446 = vmatprep.subr.mxu0 0.0
        %447 = vmatpush1.msra.mxu0 0.0
        %448 = vmatprep.subr.mxu0 0.0
        %449 = vmatpush1.msra.mxu0 0.0
        %450 = vmatprep.mubr.f32.mxu0 0.0
        %451 = vmatmul.mubr.f32.gmra.mrb[0].mxu0 %v363
        %v452 = vpop.f32.mrb[0].mxu0
        %v453 = vadd.f32 %v354, %v452
        %v454 = vpop.f32.mrb[0].mxu0
        %v455 = vadd.f32 %v358, %v454
        %456 = vmatprep.mubr.f32.mxu0 0.0
        %457 = vmatmul.mubr.f32.gmra.mrb[0].mxu0 %v366
        %v458 = vpop.f32.mrb[0].mxu0
        %v459 = vadd.f32 %v354, %v458
        %v460 = vpop.f32.mrb[0].mxu0
        %v461 = vadd.f32 %v358, %v460
        %462 = vmatprep.mubr.f32.mxu0 0.0
        %463 = vmatmul.mubr.f32.gmra.mrb[0].mxu0 %v369
        %v464 = vpop.f32.mrb[0].mxu0
        %v465 = vadd.f32 %v354, %v464
        %v466 = vpop.f32.mrb[0].mxu0
        %v467 = vadd.f32 %v358, %v466
        %468 = vmatprep.mubr.f32.mxu0 0.0
        %469 = vmatmul.mubr.f32.gmra.mrb[0].mxu0 %v372
        %v470 = vpop.f32.mrb[0].mxu0
        %v471 = vadd.f32 %v354, %v470
        %v472 = vpop.f32.mrb[0].mxu0
        %v473 = vadd.f32 %v358, %v472
        %474 = vmatprep.mubr.f32.mxu0 0.0
        %475 = vmatmul.mubr.f32.gmra.mrb[0].mxu0 %v375
        %v476 = vpop.f32.mrb[0].mxu0
        %v477 = vadd.f32 %v354, %v476
        %v478 = vpop.f32.mrb[0].mxu0
        %v479 = vadd.f32 %v358, %v478
        %480 = vmatprep.mubr.f32.mxu0 0.0
        %481 = vmatmul.mubr.f32.gmra.mrb[0].mxu0 %v378
        %v482 = vpop.f32.mrb[0].mxu0
        %v483 = vadd.f32 %v354, %v482
        %v484 = vpop.f32.mrb[0].mxu0
        %v485 = vadd.f32 %v358, %v484
        %486 = vmatprep.mubr.f32.mxu0 0.0
        %487 = vmatmul.mubr.f32.gmra.mrb[0].mxu0 %v381
        %v488 = vpop.f32.mrb[0].mxu0
        %v489 = vadd.f32 %v354, %v488
        %v490 = vpop.f32.mrb[0].mxu0
        %v491 = vadd.f32 %v358, %v490
        %492 = vmatprep.mubr.f32.mxu0 0.0
        %493 = vmatmul.mubr.f32.gmra.mrb[0].mxu0 %v384
        %v494 = vpop.f32.mrb[0].mxu0
        %v495 = vadd.f32 %v354, %v494
        %v496 = vpop.f32.mrb[0].mxu0
        %v497 = vadd.f32 %v358, %v496
        %498 = vdwg.mxu0
        %v499 = vld [vmem:[%s3] sm:$0xff]
        %v500 = vld [vmem:[%s3 + $0x8] sm:$0xff]
        %v501 = vld [vmem:[%s3 + $0x10] sm:$0xff]
        %v502 = vld [vmem:[%s3 + $0x18] sm:$0xff]
        %v503 = vld [vmem:[%s3 + $0x20] sm:$0xff]
        %v504 = vld [vmem:[%s3 + $0x28] sm:$0xff]
        %v506 = vsel %vm361, %v499, 0
        %v509 = vsel %vm361, %v500, 0
        %v512 = vsel %vm361, %v501, 0
        %v515 = vsel %vm361, %v502, 0
        %v518 = vsel %vm361, %v503, 0
        %v521 = vsel %vm361, %v504, 0
        %523 = vmatprep.subr.mxu0 0.0
        %524 = vmatpush1.msra.mxu0 %v453
        %525 = vmatprep.subr.mxu0 0.0
        %526 = vmatpush1.msra.mxu0 %v459
        %527 = vmatprep.subr.mxu0 0.0
        %528 = vmatpush1.msra.mxu0 %v465
        %529 = vmatprep.subr.mxu0 0.0
        %530 = vmatpush1.msra.mxu0 %v471
        %531 = vmatprep.subr.mxu0 0.0
        %532 = vmatpush1.msra.mxu0 %v477
        %533 = vmatprep.subr.mxu0 0.0
        %534 = vmatpush1.msra.mxu0 %v483
        %535 = vmatprep.subr.mxu0 0.0
        %536 = vmatpush1.msra.mxu0 %v489
        %537 = vmatprep.subr.mxu0 0.0
        %538 = vmatpush1.msra.mxu0 %v495
        %539 = vmatprep.subr.mxu0 0.0
        %540 = vmatpush1.msra.mxu0 0.0
        %541 = vmatprep.subr.mxu0 0.0
        %542 = vmatpush1.msra.mxu0 0.0
        %543 = vmatprep.subr.mxu0 0.0
        %544 = vmatpush1.msra.mxu0 0.0
        %545 = vmatprep.subr.mxu0 0.0
        %546 = vmatpush1.msra.mxu0 0.0
        %547 = vmatprep.subr.mxu0 0.0
        %548 = vmatpush1.msra.mxu0 0.0
        %549 = vmatprep.subr.mxu0 0.0
        %550 = vmatpush1.msra.mxu0 0.0
        %551 = vmatprep.subr.mxu0 0.0
        %552 = vmatpush1.msra.mxu0 0.0
        %553 = vmatprep.subr.mxu0 0.0
        %554 = vmatpush1.msra.mxu0 0.0
        %555 = vmatprep.subr.mxu0 0.0
        %556 = vmatpush1.msra.mxu0 0.0
        %557 = vmatprep.subr.mxu0 0.0
        %558 = vmatpush1.msra.mxu0 0.0
        %559 = vmatprep.subr.mxu0 0.0
        %560 = vmatpush1.msra.mxu0 0.0
        %561 = vmatprep.subr.mxu0 0.0
        %562 = vmatpush1.msra.mxu0 0.0
        %563 = vmatprep.subr.mxu0 0.0
        %564 = vmatpush1.msra.mxu0 0.0
        %565 = vmatprep.subr.mxu0 0.0
        %566 = vmatpush1.msra.mxu0 0.0
        %567 = vmatprep.subr.mxu0 0.0
        %568 = vmatpush1.msra.mxu0 0.0
        %569 = vmatprep.subr.mxu0 0.0
        %570 = vmatpush1.msra.mxu0 0.0
        %571 = vmatprep.subr.mxu0 0.0
        %572 = vmatpush1.msra.mxu0 0.0
        %573 = vmatprep.subr.mxu0 0.0
        %574 = vmatpush1.msra.mxu0 0.0
        %575 = vmatprep.subr.mxu0 0.0
        %576 = vmatpush1.msra.mxu0 0.0
        %577 = vmatprep.subr.mxu0 0.0
        %578 = vmatpush1.msra.mxu0 0.0
        %579 = vmatprep.subr.mxu0 0.0
        %580 = vmatpush1.msra.mxu0 0.0
        %581 = vmatprep.subr.mxu0 0.0
        %582 = vmatpush1.msra.mxu0 0.0
        %583 = vmatprep.subr.mxu0 0.0
        %584 = vmatpush1.msra.mxu0 0.0
        %585 = vmatprep.subr.mxu0 0.0
        %586 = vmatpush1.msra.mxu0 0.0
        %587 = vmatprep.mubr.f32.mxu0 0.0
        %588 = vmatmul.mubr.f32.gmra.mrb[0].mxu0 %v506
        %v589 = vpop.f32.mrb[0].mxu0
        %v590 = vadd.f32 0.0, %v589
        %v591 = vpop.f32.mrb[0].mxu0
        %592 = vmatprep.mubr.f32.mxu0 0.0
        %593 = vmatmul.mubr.f32.gmra.mrb[0].mxu0 %v509
        %v594 = vpop.f32.mrb[0].mxu0
        %v595 = vadd.f32 0.0, %v594
        %v596 = vpop.f32.mrb[0].mxu0
        %597 = vmatprep.mubr.f32.mxu0 0.0
        %598 = vmatmul.mubr.f32.gmra.mrb[0].mxu0 %v512
        %v599 = vpop.f32.mrb[0].mxu0
        %v600 = vadd.f32 0.0, %v599
        %v601 = vpop.f32.mrb[0].mxu0
        %602 = vmatprep.mubr.f32.mxu0 0.0
        %603 = vmatmul.mubr.f32.gmra.mrb[0].mxu0 %v515
        %v604 = vpop.f32.mrb[0].mxu0
        %v605 = vadd.f32 0.0, %v604
        %v606 = vpop.f32.mrb[0].mxu0
        %607 = vmatprep.mubr.f32.mxu0 0.0
        %608 = vmatmul.mubr.f32.gmra.mrb[0].mxu0 %v518
        %v609 = vpop.f32.mrb[0].mxu0
        %v610 = vadd.f32 0.0, %v609
        %v611 = vpop.f32.mrb[0].mxu0
        %612 = vmatprep.mubr.f32.mxu0 0.0
        %613 = vmatmul.mubr.f32.gmra.mrb[0].mxu0 %v521
        %v614 = vpop.f32.mrb[0].mxu0
        %v615 = vadd.f32 0.0, %v614
        %v616 = vpop.f32.mrb[0].mxu0
        %617 = vdwg.mxu0
        %621 = vrot.lane.b32.xlu0 %v590, 64
        %v622 = vpop.permute.xlu0 %621
        %623 = vrot.lane.b32.xlu0 %v595, 64
        %v624 = vpop.permute.xlu0 %623
        %625 = vrot.lane.b32.xlu0 %v600, 64
        %v626 = vpop.permute.xlu0 %625
        %v630 = vmul.f32 %v590, %v622
        %v631 = vmul.f32 %v595, %v624
        %v632 = vmul.f32 %v600, %v626
        %636 = vrot.lane.b32.xlu0 %v605, 64
        %v637 = vpop.permute.xlu0 %636
        %638 = vrot.lane.b32.xlu0 %v610, 64
        %v639 = vpop.permute.xlu0 %638
        %640 = vrot.lane.b32.xlu0 %v615, 64
        %v641 = vpop.permute.xlu0 %640
        %v645 = vmul.f32 %v605, %v637
        %v646 = vmul.f32 %v610, %v639
        %v647 = vmul.f32 %v615, %v641
        %v648 = vadd.f32 %v630, %v645
        %v649 = vadd.f32 %v631, %v646
        %v650 = vadd.f32 %v632, %v647
        %v651 = vsel %vm361, %v648, 0.0
        %652 = vadd.xlane.f32.xlu0 %v651
        %v653 = vpop.xlane.xlu0 %652
        %v654 = vsel %vm361, %v649, 0.0
        %655 = vadd.xlane.f32.xlu0 %v654
        %v656 = vpop.xlane.xlu0 %655
        %v657 = vsel %vm361, %v650, 0.0
        %658 = vadd.xlane.f32.xlu0 %v657
        %v659 = vpop.xlane.xlu0 %658
        %v660 = vrcp.pop 64.0
        %v661 = vmul.f32 %v653, %v660
        %v662 = vmul.f32 %v656, %v660
        %v663 = vmul.f32 %v659, %v660
        %v664 = vmul.f32 %v605, %v622
        %v665 = vmul.f32 %v610, %v624
        %v666 = vmul.f32 %v615, %v626
        %v667 = vmul.f32 %v590, %v637
        %v668 = vmul.f32 %v595, %v639
        %v669 = vmul.f32 %v600, %v641
        %v670 = vsub.f32 %v664, %v667
        %v671 = vsub.f32 %v665, %v668
        %v672 = vsub.f32 %v666, %v669
        %v673 = vsel %vm361, %v670, 0.0
        %674 = vadd.xlane.f32.xlu0 %v673
        %v675 = vpop.xlane.xlu0 %674
        %v676 = vsel %vm361, %v671, 0.0
        %677 = vadd.xlane.f32.xlu0 %v676
        %v678 = vpop.xlane.xlu0 %677
        %v679 = vsel %vm361, %v672, 0.0
        %680 = vadd.xlane.f32.xlu0 %v679
        %v681 = vpop.xlane.xlu0 %680
        %v682 = vmul.f32 %v675, %v660
        %v683 = vmul.f32 %v678, %v660
        %v684 = vmul.f32 %v681, %v660
        %v685 = vld [vmem:[%s4] sm:$0xff]
        %v686 = vld [vmem:[%s4 + $0x8] sm:$0xff]
        %v687 = vld [vmem:[%s4 + $0x10] sm:$0xff]
        %v688 = vld [vmem:[%s4 + $0x18] sm:$0xff]
        %v689 = vld [vmem:[%s4 + $0x20] sm:$0xff]
        %v690 = vld [vmem:[%s4 + $0x28] sm:$0xff]
        %v691 = vld [vmem:[%s4 + $0x30] sm:$0xff]
        %v692 = vld [vmem:[%s4 + $0x38] sm:$0xff]
        %vm693 = vcmask 392192
        %v695 = vsel %vm693, %v685, 0
        %v698 = vsel %vm693, %v686, 0
        %v701 = vsel %vm693, %v687, 0
        %v704 = vsel %vm693, %v688, 0
        %v707 = vsel %vm693, %v689, 0
        %v710 = vsel %vm693, %v690, 0
        %v713 = vsel %vm693, %v691, 0
        %v716 = vsel %vm693, %v692, 0
        %718 = vmatprep.subr.mxu0 0.0
        %719 = vmatpush1.msra.mxu0 %v661
        %720 = vmatprep.subr.mxu0 0.0
        %721 = vmatpush1.msra.mxu0 %v662
        %722 = vmatprep.subr.mxu0 0.0
        %723 = vmatpush1.msra.mxu0 %v663
        %724 = vmatprep.subr.mxu0 0.0
        %725 = vmatpush1.msra.mxu0 %v682
        %726 = vmatprep.subr.mxu0 0.0
        %727 = vmatpush1.msra.mxu0 %v683
        %728 = vmatprep.subr.mxu0 0.0
        %729 = vmatpush1.msra.mxu0 %v684
        %730 = vmatprep.subr.mxu0 0.0
        %731 = vmatpush1.msra.mxu0 0.0
        %732 = vmatprep.subr.mxu0 0.0
        %733 = vmatpush1.msra.mxu0 0.0
        %734 = vmatprep.subr.mxu0 0.0
        %735 = vmatpush1.msra.mxu0 0.0
        %736 = vmatprep.subr.mxu0 0.0
        %737 = vmatpush1.msra.mxu0 0.0
        %738 = vmatprep.subr.mxu0 0.0
        %739 = vmatpush1.msra.mxu0 0.0
        %740 = vmatprep.subr.mxu0 0.0
        %741 = vmatpush1.msra.mxu0 0.0
        %742 = vmatprep.subr.mxu0 0.0
        %743 = vmatpush1.msra.mxu0 0.0
        %744 = vmatprep.subr.mxu0 0.0
        %745 = vmatpush1.msra.mxu0 0.0
        %746 = vmatprep.subr.mxu0 0.0
        %747 = vmatpush1.msra.mxu0 0.0
        %748 = vmatprep.subr.mxu0 0.0
        %749 = vmatpush1.msra.mxu0 0.0
        %750 = vmatprep.subr.mxu0 0.0
        %751 = vmatpush1.msra.mxu0 0.0
        %752 = vmatprep.subr.mxu0 0.0
        %753 = vmatpush1.msra.mxu0 0.0
        %754 = vmatprep.subr.mxu0 0.0
        %755 = vmatpush1.msra.mxu0 0.0
        %756 = vmatprep.subr.mxu0 0.0
        %757 = vmatpush1.msra.mxu0 0.0
        %758 = vmatprep.subr.mxu0 0.0
        %759 = vmatpush1.msra.mxu0 0.0
        %760 = vmatprep.subr.mxu0 0.0
        %761 = vmatpush1.msra.mxu0 0.0
        %762 = vmatprep.subr.mxu0 0.0
        %763 = vmatpush1.msra.mxu0 0.0
        %764 = vmatprep.subr.mxu0 0.0
        %765 = vmatpush1.msra.mxu0 0.0
        %766 = vmatprep.subr.mxu0 0.0
        %767 = vmatpush1.msra.mxu0 0.0
        %768 = vmatprep.subr.mxu0 0.0
        %769 = vmatpush1.msra.mxu0 0.0
        %770 = vmatprep.subr.mxu0 0.0
        %771 = vmatpush1.msra.mxu0 0.0
        %772 = vmatprep.subr.mxu0 0.0
        %773 = vmatpush1.msra.mxu0 0.0
        %774 = vmatprep.subr.mxu0 0.0
        %775 = vmatpush1.msra.mxu0 0.0
        %776 = vmatprep.subr.mxu0 0.0
        %777 = vmatpush1.msra.mxu0 0.0
        %778 = vmatprep.subr.mxu0 0.0
        %779 = vmatpush1.msra.mxu0 0.0
        %780 = vmatprep.subr.mxu0 0.0
        %781 = vmatpush1.msra.mxu0 0.0
        %782 = vmatprep.mubr.f32.mxu0 0.0
        %783 = vmatmul.mubr.f32.gmra.mrb[0].mxu0 %v695
        %v784 = vpop.f32.mrb[0].mxu0
        %v785 = vadd.f32 0.0, %v784
        %v786 = vpop.f32.mrb[0].mxu0
        %787 = vmatprep.mubr.f32.mxu0 0.0
        %788 = vmatmul.mubr.f32.gmra.mrb[0].mxu0 %v698
        %v789 = vpop.f32.mrb[0].mxu0
        %v790 = vadd.f32 0.0, %v789
        %v791 = vpop.f32.mrb[0].mxu0
        %792 = vmatprep.mubr.f32.mxu0 0.0
        %793 = vmatmul.mubr.f32.gmra.mrb[0].mxu0 %v701
        %v794 = vpop.f32.mrb[0].mxu0
        %v795 = vadd.f32 0.0, %v794
        %v796 = vpop.f32.mrb[0].mxu0
        %797 = vmatprep.mubr.f32.mxu0 0.0
        %798 = vmatmul.mubr.f32.gmra.mrb[0].mxu0 %v704
        %v799 = vpop.f32.mrb[0].mxu0
        %v800 = vadd.f32 0.0, %v799
        %v801 = vpop.f32.mrb[0].mxu0
        %802 = vmatprep.mubr.f32.mxu0 0.0
        %803 = vmatmul.mubr.f32.gmra.mrb[0].mxu0 %v707
        %v804 = vpop.f32.mrb[0].mxu0
        %v805 = vadd.f32 0.0, %v804
        %v806 = vpop.f32.mrb[0].mxu0
        %807 = vmatprep.mubr.f32.mxu0 0.0
        %808 = vmatmul.mubr.f32.gmra.mrb[0].mxu0 %v710
        %v809 = vpop.f32.mrb[0].mxu0
        %v810 = vadd.f32 0.0, %v809
        %v811 = vpop.f32.mrb[0].mxu0
        %812 = vmatprep.mubr.f32.mxu0 0.0
        %813 = vmatmul.mubr.f32.gmra.mrb[0].mxu0 %v713
        %v814 = vpop.f32.mrb[0].mxu0
        %v815 = vadd.f32 0.0, %v814
        %v816 = vpop.f32.mrb[0].mxu0
        %817 = vmatprep.mubr.f32.mxu0 0.0
        %818 = vmatmul.mubr.f32.gmra.mrb[0].mxu0 %v716
        %v819 = vpop.f32.mrb[0].mxu0
        %v820 = vadd.f32 0.0, %v819
        %v821 = vpop.f32.mrb[0].mxu0
        %822 = vdwg.mxu0
        %vm823 = vcmask 7168
        %824 = vst.msk [vmem:[%s324] sm:$0xff] %vm823, %v785
        %825 = vst.msk [vmem:[%s324 + $0x8] sm:$0xff] %vm823, %v790
        %826 = vst.msk [vmem:[%s324 + $0x10] sm:$0xff] %vm823, %v795
        %827 = vst.msk [vmem:[%s324 + $0x18] sm:$0xff] %vm823, %v800
        %828 = vst.msk [vmem:[%s324 + $0x20] sm:$0xff] %vm823, %v805
        %829 = vst.msk [vmem:[%s324 + $0x28] sm:$0xff] %vm823, %v810
        %830 = vst.msk [vmem:[%s324 + $0x30] sm:$0xff] %vm823, %v815
        %831 = vst.msk [vmem:[%s324 + $0x38] sm:$0xff] %vm823, %v820
        %v832 = vld [vmem:[%s5] sm:$0xff]
        %v833 = vld [vmem:[%s5 + $0x8] sm:$0xff]
        %v834 = vld [vmem:[%s5 + $0x10] sm:$0xff]
        %v835 = vld [vmem:[%s5 + $0x18] sm:$0xff]
        %v836 = vld [vmem:[%s5 + $0x20] sm:$0xff]
        %v837 = vld [vmem:[%s5 + $0x28] sm:$0xff]
        %v838 = vld [vmem:[%s5 + $0x30] sm:$0xff]
        %v839 = vld [vmem:[%s5 + $0x38] sm:$0xff]
        %v841 = vsel %vm361, %v832, 0
        %v844 = vsel %vm361, %v833, 0
        %v847 = vsel %vm361, %v834, 0
        %v850 = vsel %vm361, %v835, 0
        %v853 = vsel %vm361, %v836, 0
        %v856 = vsel %vm361, %v837, 0
        %v859 = vsel %vm361, %v838, 0
        %v862 = vsel %vm361, %v839, 0
        %864 = vmatprep.subr.mxu0 %v455
        %865 = vmatpush1.msra.mxu0 %v453
        %866 = vmatprep.subr.mxu0 %v461
        %867 = vmatpush1.msra.mxu0 %v459
        %868 = vmatprep.subr.mxu0 %v467
        %869 = vmatpush1.msra.mxu0 %v465
        %870 = vmatprep.subr.mxu0 %v473
        %871 = vmatpush1.msra.mxu0 %v471
        %872 = vmatprep.subr.mxu0 %v479
        %873 = vmatpush1.msra.mxu0 %v477
        %874 = vmatprep.subr.mxu0 %v485
        %875 = vmatpush1.msra.mxu0 %v483
        %876 = vmatprep.subr.mxu0 %v491
        %877 = vmatpush1.msra.mxu0 %v489
        %878 = vmatprep.subr.mxu0 %v497
        %879 = vmatpush1.msra.mxu0 %v495
        %880 = vmatprep.subr.mxu0 0.0
        %881 = vmatpush1.msra.mxu0 0.0
        %882 = vmatprep.subr.mxu0 0.0
        %883 = vmatpush1.msra.mxu0 0.0
        %884 = vmatprep.subr.mxu0 0.0
        %885 = vmatpush1.msra.mxu0 0.0
        %886 = vmatprep.subr.mxu0 0.0
        %887 = vmatpush1.msra.mxu0 0.0
        %888 = vmatprep.subr.mxu0 0.0
        %889 = vmatpush1.msra.mxu0 0.0
        %890 = vmatprep.subr.mxu0 0.0
        %891 = vmatpush1.msra.mxu0 0.0
        %892 = vmatprep.subr.mxu0 0.0
        %893 = vmatpush1.msra.mxu0 0.0
        %894 = vmatprep.subr.mxu0 0.0
        %895 = vmatpush1.msra.mxu0 0.0
        %896 = vmatprep.subr.mxu0 0.0
        %897 = vmatpush1.msra.mxu0 0.0
        %898 = vmatprep.subr.mxu0 0.0
        %899 = vmatpush1.msra.mxu0 0.0
        %900 = vmatprep.subr.mxu0 0.0
        %901 = vmatpush1.msra.mxu0 0.0
        %902 = vmatprep.subr.mxu0 0.0
        %903 = vmatpush1.msra.mxu0 0.0
        %904 = vmatprep.subr.mxu0 0.0
        %905 = vmatpush1.msra.mxu0 0.0
        %906 = vmatprep.subr.mxu0 0.0
        %907 = vmatpush1.msra.mxu0 0.0
        %908 = vmatprep.subr.mxu0 0.0
        %909 = vmatpush1.msra.mxu0 0.0
        %910 = vmatprep.subr.mxu0 0.0
        %911 = vmatpush1.msra.mxu0 0.0
        %912 = vmatprep.subr.mxu0 0.0
        %913 = vmatpush1.msra.mxu0 0.0
        %914 = vmatprep.subr.mxu0 0.0
        %915 = vmatpush1.msra.mxu0 0.0
        %916 = vmatprep.subr.mxu0 0.0
        %917 = vmatpush1.msra.mxu0 0.0
        %918 = vmatprep.subr.mxu0 0.0
        %919 = vmatpush1.msra.mxu0 0.0
        %920 = vmatprep.subr.mxu0 0.0
        %921 = vmatpush1.msra.mxu0 0.0
        %922 = vmatprep.subr.mxu0 0.0
        %923 = vmatpush1.msra.mxu0 0.0
        %924 = vmatprep.subr.mxu0 0.0
        %925 = vmatpush1.msra.mxu0 0.0
        %926 = vmatprep.subr.mxu0 0.0
        %927 = vmatpush1.msra.mxu0 0.0
        %928 = vmatprep.mubr.f32.mxu0 0.0
        %929 = vmatmul.mubr.f32.gmra.mrb[0].mxu0 %v841
        %v930 = vpop.f32.mrb[0].mxu0
        %v931 = vadd.f32 0.0, %v930
        %v932 = vpop.f32.mrb[0].mxu0
        %v933 = vadd.f32 0.0, %v932
        %934 = vmatprep.mubr.f32.mxu0 0.0
        %935 = vmatmul.mubr.f32.gmra.mrb[0].mxu0 %v844
        %v936 = vpop.f32.mrb[0].mxu0
        %v937 = vadd.f32 0.0, %v936
        %v938 = vpop.f32.mrb[0].mxu0
        %v939 = vadd.f32 0.0, %v938
        %940 = vmatprep.mubr.f32.mxu0 0.0
        %941 = vmatmul.mubr.f32.gmra.mrb[0].mxu0 %v847
        %v942 = vpop.f32.mrb[0].mxu0
        %v943 = vadd.f32 0.0, %v942
        %v944 = vpop.f32.mrb[0].mxu0
        %v945 = vadd.f32 0.0, %v944
        %946 = vmatprep.mubr.f32.mxu0 0.0
        %947 = vmatmul.mubr.f32.gmra.mrb[0].mxu0 %v850
        %v948 = vpop.f32.mrb[0].mxu0
        %v949 = vadd.f32 0.0, %v948
        %v950 = vpop.f32.mrb[0].mxu0
        %v951 = vadd.f32 0.0, %v950
        %952 = vmatprep.mubr.f32.mxu0 0.0
        %953 = vmatmul.mubr.f32.gmra.mrb[0].mxu0 %v853
        %v954 = vpop.f32.mrb[0].mxu0
        %v955 = vadd.f32 0.0, %v954
        %v956 = vpop.f32.mrb[0].mxu0
        %v957 = vadd.f32 0.0, %v956
        %958 = vmatprep.mubr.f32.mxu0 0.0
        %959 = vmatmul.mubr.f32.gmra.mrb[0].mxu0 %v856
        %v960 = vpop.f32.mrb[0].mxu0
        %v961 = vadd.f32 0.0, %v960
        %v962 = vpop.f32.mrb[0].mxu0
        %v963 = vadd.f32 0.0, %v962
        %964 = vmatprep.mubr.f32.mxu0 0.0
        %965 = vmatmul.mubr.f32.gmra.mrb[0].mxu0 %v859
        %v966 = vpop.f32.mrb[0].mxu0
        %v967 = vadd.f32 0.0, %v966
        %v968 = vpop.f32.mrb[0].mxu0
        %v969 = vadd.f32 0.0, %v968
        %970 = vmatprep.mubr.f32.mxu0 0.0
        %971 = vmatmul.mubr.f32.gmra.mrb[0].mxu0 %v862
        %v972 = vpop.f32.mrb[0].mxu0
        %v973 = vadd.f32 0.0, %v972
        %v974 = vpop.f32.mrb[0].mxu0
        %v975 = vadd.f32 0.0, %v974
        %976 = vdwg.mxu0
        %985 = vrot.lane.b32.xlu0 %v455, 64
        %v986 = vpop.permute.xlu0 %985
        %987 = vrot.lane.b32.xlu0 %v461, 64
        %v988 = vpop.permute.xlu0 %987
        %989 = vrot.lane.b32.xlu0 %v467, 64
        %v990 = vpop.permute.xlu0 %989
        %991 = vrot.lane.b32.xlu0 %v473, 64
        %v992 = vpop.permute.xlu0 %991
        %993 = vrot.lane.b32.xlu0 %v479, 64
        %v994 = vpop.permute.xlu0 %993
        %995 = vrot.lane.b32.xlu0 %v485, 64
        %v996 = vpop.permute.xlu0 %995
        %997 = vrot.lane.b32.xlu0 %v491, 64
        %v998 = vpop.permute.xlu0 %997
        %999 = vrot.lane.b32.xlu0 %v497, 64
        %v1000 = vpop.permute.xlu0 %999
        %v1009 = vsel %vm361, %v933, %v986
        %v1010 = vsel %vm361, %v939, %v988
        %v1011 = vsel %vm361, %v945, %v990
        %v1012 = vsel %vm361, %v951, %v992
        %v1013 = vsel %vm361, %v957, %v994
        %v1014 = vsel %vm361, %v963, %v996
        %v1015 = vsel %vm361, %v969, %v998
        %v1016 = vsel %vm361, %v975, %v1000
        %1017 = vst [vmem:[%s312] sm:$0xff] %v931
        %1018 = vst [vmem:[%s312 + $0x8] sm:$0xff] %v1009
        %1019 = vst [vmem:[%s312 + $0x10] sm:$0xff] %v937
        %1020 = vst [vmem:[%s312 + $0x18] sm:$0xff] %v1010
        %1021 = vst [vmem:[%s312 + $0x20] sm:$0xff] %v943
        %1022 = vst [vmem:[%s312 + $0x28] sm:$0xff] %v1011
        %1023 = vst [vmem:[%s312 + $0x30] sm:$0xff] %v949
        %1024 = vst [vmem:[%s312 + $0x38] sm:$0xff] %v1012
        %1025 = vst [vmem:[%s312 + $0x40] sm:$0xff] %v955
        %1026 = vst [vmem:[%s312 + $0x48] sm:$0xff] %v1013
        %1027 = vst [vmem:[%s312 + $0x50] sm:$0xff] %v961
        %1028 = vst [vmem:[%s312 + $0x58] sm:$0xff] %v1014
        %1029 = vst [vmem:[%s312 + $0x60] sm:$0xff] %v967
        %1030 = vst [vmem:[%s312 + $0x68] sm:$0xff] %v1015
        %1031 = vst [vmem:[%s312 + $0x70] sm:$0xff] %v973
        %1032 = vst [vmem:[%s312 + $0x78] sm:$0xff] %v1016
        %s1033 = sand.u32 %s165, 1
        %s1034 = scalar_lea.sflag [#allocation4], %s1033
        %s1035 = sand.u32 %s165, 1
        %s1036 = smul.addr %s1035, 128
        %s1037 = scalar_lea.vmem [#allocation7], %s1036
        %p1038 = scmp.lt.s32.totalorder %s26, 1
        %s1039 = scalar_select %p1038, %s26, 1
        %s1040 = smul.addr %s1039, 8
        %s1041 = smul.addr %s1040, 8
        %s1042 = scalar_lea.vmem %s7, %s1041
        // Predicated region
        $region53: #{tpu_custom_call.1} parent=43 // pred_check
          %p1043 = pneg %p175
        $region54: #{tpu_custom_call.1} parent=43 // pred_check_branch
          %1045 = sbr.rel (%p1043) target = $region56
        $region55: #{tpu_custom_call.1} parent=43 // pred_region
          %s1047 = ssub.s32 2048, 2048
          %1048 = vsyncadd %s1034, %s1047
          %s1049 = smul.addr %s26, 16
          %s1050 = smul.addr %s1049, 128
          %s1051 = scalar_lea.hbm %s6, %s1050
          %s1052 = sshll.u32 %s1037, 4
          %s1053 = int_to_ptr.vmem [resolvable:$true] %s1052
          %1058 = dma.vmem_to_hbm [thread:$0]  %s1053, 2048, %s1051, %s1034, 256, 256, 16
        $region56: #{tpu_custom_call.1} parent=43 // pred_fallthru
          _
        // Predicated region
        $region57: #{tpu_custom_call.1} parent=43 // pred_check
          %p1059 = pneg %p201
        $region58: #{tpu_custom_call.1} parent=43 // pred_check_branch
          %1061 = sbr.rel (%p1059) target = $region60
        $region59: #{tpu_custom_call.1} parent=43 // pred_region
          _
        $region60: #{tpu_custom_call.1} parent=43 // pred_fallthru
          _
      $region44: #{tpu_custom_call.1} parent=5 // pred_fallthru
        _
      %p1062 = scmp.le.s32.totalorder 2, %s21
      // Predicated region
      $region61: #{tpu_custom_call.1} parent=5 // pred_check
        %p1063 = pneg %p1062
      $region62: #{tpu_custom_call.1} parent=5 // pred_check_branch
        %1065 = sbr.rel (%p1063) target = $region64
      $region63: #{tpu_custom_call.1} parent=5 // pred_region
        %s1066 = ssub.s32 %s21, 2
        // Predicated region
        $region65: #{tpu_custom_call.1} parent=63 // pred_check
          %p1067 = pneg %p181
        $region66: #{tpu_custom_call.1} parent=63 // pred_check_branch
          %1069 = sbr.rel (%p1067) target = $region68
        $region67: #{tpu_custom_call.1} parent=63 // pred_region
          %s1070 = sand.u32 %s166, 1
          %s1071 = scalar_lea.sflag [#allocation4], %s1070
          %s1072 = sand.u32 %s166, 1
          %s1073 = smul.addr %s1072, 128
          %s1074 = scalar_lea.vmem [#allocation7], %s1073
          %1075 = dma.done %s1071, 2048
        $region68: #{tpu_custom_call.1} parent=63 // pred_fallthru
          _
        // Predicated region
        $region69: #{tpu_custom_call.1} parent=63 // pred_check
          %p1076 = pneg %p207
        $region70: #{tpu_custom_call.1} parent=63 // pred_check_branch
          %1078 = sbr.rel (%p1076) target = $region72
        $region71: #{tpu_custom_call.1} parent=63 // pred_region
          %p1079 = scmp.lt.s32.totalorder %s27, 1
          %s1080 = scalar_select %p1079, %s27, 1
          %s1081 = smul.addr %s1080, 8
          %s1082 = smul.addr %s1081, 8
          %s1083 = scalar_lea.vmem %s7, %s1082
        $region72: #{tpu_custom_call.1} parent=63 // pred_fallthru
          _
      $region64: #{tpu_custom_call.1} parent=5 // pred_fallthru
        _
    $region6: #{tpu_custom_call.1} parent=1 // loop_footer
      %s25 = sadd.s32 1, %s21
    $region7: #{tpu_custom_call.1} parent=1 // loop_footer_branch
      %20 = sbr.rel target = $region3
    $region8: #{tpu_custom_call.1} parent=1 // loop_exit
      _
    %1084 = vsyncpa [#allocation3], 1
    %s1085 = scalar_lea.sflag [#allocation3], 1
    %1086 = vsyncpa %s1085, 1
    %1087 = vsyncpa [#allocation6], 1
    %1088 = vsyncpa [#allocation4], 1
    %s1089 = scalar_lea.sflag [#allocation4], 1
    %1090 = vsyncpa %s1089, 1

</llo_original>
